<compile_context>
chip_gen: v5e
topology: v5e:2x2
jax: 0.10.0
libtpu: 0.0.40
codegen_flags: <defaults>
</compile_context>

<pallas_src>
import jax
import jax.numpy as jnp
from jax.experimental import pallas as pl
from jax.experimental.pallas import tpu as pltpu

_LANE = 128
_NEG = -1e30          # "minus infinity" bias for padded state columns
_TB_TARGET = 2048     # target batch rows per grid step (fits every VMEM budget)
_MIN_SPLIT_B = 64     # batches >= this get >=2 grid steps (v7x megacore)


def _round_up(x, m):
    return ((x + m - 1) // m) * m


# --------------------------------------------------------------------------
# Kernel: fc1(+folded BN) + ReLU -> fc2 + ReLU -> fc3 -> log_softmax
# --------------------------------------------------------------------------
def viterbinet_kernel(y_ref, w1_ref, w2_ref, w3_ref, b_ref, o_ref):
    HP = w2_ref.shape[1]          # padded hidden dim (multiple of 128)
    SP = w3_ref.shape[1]          # padded num_states (multiple of 128)
    cdt = w2_ref.dtype            # fc2/fc3 matmul compute dtype (bf16 or f32)

    b = b_ref[...]                # (3, BP) f32 packed biases, resident in VMEM

    # fc1 (BatchNorm folded into weights/bias), f32 (tiny K), + ReLU
    x = jnp.dot(y_ref[...], w1_ref[...], preferred_element_type=jnp.float32)
    x = jnp.maximum(x + b[0:1, :HP], 0.0)

    # fc2 + ReLU  (dropout == identity at inference)
    x = jnp.dot(x.astype(cdt), w2_ref[...], preferred_element_type=jnp.float32)
    x = jnp.maximum(x + b[1:2, :HP], 0.0)

    # fc3 (padded state columns carry a -1e30 bias -> excluded from softmax)
    logits = jnp.dot(x.astype(cdt), w3_ref[...],
                     preferred_element_type=jnp.float32)
    logits = logits + b[2:3, :SP]

    # numerically stable log_softmax over states; f32 math, cast at the store
    m = jnp.max(logits, axis=1, keepdims=True)
    z = logits - m
    lse = jnp.log(jnp.sum(jnp.exp(z), axis=1, keepdims=True))
    o_ref[...] = (z - lse).astype(o_ref.dtype)


# --------------------------------------------------------------------------
# One-time parameter preparation (hoisted out of the per-call path)
# --------------------------------------------------------------------------
def prepare_params(params, *, compute_dtype=jnp.bfloat16, eps=1e-5):
    """Fold eval-mode BN into fc1, pad features to 128 lanes, cast, pack biases."""
    w1, b1, gamma, beta, run_mean, run_var, w2, b2, w3, b3 = params
    W, H = w1.shape
    S = w3.shape[1]
    HP = _round_up(H, _LANE)
    SP = _round_up(S, _LANE)
    BP = max(HP, SP)

    scale = gamma * jax.lax.rsqrt(run_var + eps)            # (H,)
    shift = beta - run_mean * scale
    w1f = w1 * scale[None, :]
    b1f = b1 * scale + shift

    # fc1 stays f32 (negligible cost, preserves input precision);
    # fc2/fc3 operands in compute_dtype (bf16 keeps v5e off the f32 MXU path).
    w1p = jnp.pad(w1f, ((0, 0), (0, HP - H))).astype(jnp.float32)
    w2p = jnp.pad(w2, ((0, HP - H), (0, HP - H))).astype(compute_dtype)
    w3p = jnp.pad(w3, ((0, HP - H), (0, SP - S))).astype(compute_dtype)

    b1p = jnp.pad(b1f, (0, BP - H))
    b2p = jnp.pad(b2, (0, BP - H))
    b3p = jnp.full((BP,), _NEG, jnp.float32).at[:S].set(b3)
    bstack = jnp.stack([b1p, b2p, b3p], axis=0).astype(jnp.float32)  # (3, BP)

    return {"w1": w1p, "w2": w2p, "w3": w3p, "bias": bstack,
            "window": W, "hidden": H, "states": S}


# --------------------------------------------------------------------------
# Per-call forward
# --------------------------------------------------------------------------
def viterbinet_forward(y, prepared, window_size, *,
                       out_dtype=jnp.float32, padded_output=False):
    # PyTorch forward's input-shaping branches.
    if y.ndim == 3:
        y = y.reshape(y.shape[0], -1)
    elif y.ndim == 2 and y.shape[1] == 1 and window_size > 1:
        y = jnp.tile(y, (1, window_size))
    y = y.astype(jnp.float32)

    w1, w2, w3 = prepared["w1"], prepared["w2"], prepared["w3"]
    bstack = prepared["bias"]
    S = prepared["states"]
    B, W = y.shape
    HP = w2.shape[1]
    SP = w3.shape[1]
    BP = bstack.shape[1]

    # Even batch split: large tiles amortize per-step overhead, padding waste
    # is at most TB-1 rows, and >=2 (even) steps let v7x shard across both TCs.
    n_steps = max(1, pl.cdiv(B, _TB_TARGET))
    if B >= _MIN_SPLIT_B:
        n_steps = max(n_steps, 2)
    if n_steps > 1:
        n_steps += n_steps % 2                    # even step count
    TB = _round_up(pl.cdiv(B, n_steps), 8)
    B_pad = _round_up(B, TB)
    if B_pad != B:
        y = jnp.pad(y, ((0, B_pad - B), (0, 0)))
    grid = (B_pad // TB,)

    out = pl.pallas_call(
        viterbinet_kernel,
        out_shape=jax.ShapeDtypeStruct((B_pad, SP), out_dtype),
        grid=grid,
        in_specs=[
            pl.BlockSpec((TB, W), lambda i: (i, 0)),      # activations (pipelined)
            pl.BlockSpec((W, HP), lambda i: (0, 0)),      # fc1 weights (resident)
            pl.BlockSpec((HP, HP), lambda i: (0, 0)),     # fc2 weights (resident)
            pl.BlockSpec((HP, SP), lambda i: (0, 0)),     # fc3 weights (resident)
            pl.BlockSpec((3, BP), lambda i: (0, 0)),      # packed biases (resident)
        ],
        out_specs=pl.BlockSpec((TB, SP), lambda i: (i, 0)),
        compiler_params=pltpu.CompilerParams(
            dimension_semantics=("parallel",),            # megacore on v7x
        ),
    )(y, w1, w2, w3, bstack)

    if padded_output:
        # Skip the post-kernel slice (avoids a second HBM pass); valid data is
        # out[:B, :S], padded state columns hold ~-1e30 log-probs.
        return out
    return out[:B, :S]


# --------------------------------------------------------------------------
# Deterministic params + pure-JAX reference
# --------------------------------------------------------------------------
def init_params(key, window_size, hidden_dim, num_states):
    ks = jax.random.split(key, 6)
    # Linear weights stored as (in, out) (PyTorch stores (out, in)).
    w1 = jax.random.normal(ks[0], (window_size, hidden_dim), jnp.float32) * 0.2
    b1 = jax.random.normal(ks[1], (hidden_dim,), jnp.float32) * 0.1
    w2 = jax.random.normal(ks[2], (hidden_dim, hidden_dim), jnp.float32) * 0.2
    b2 = jax.random.normal(ks[3], (hidden_dim,), jnp.float32) * 0.1
    w3 = jax.random.normal(ks[4], (hidden_dim, num_states), jnp.float32) * 0.2
    b3 = jax.random.normal(ks[5], (num_states,), jnp.float32) * 0.1
    gamma = jnp.ones((hidden_dim,), jnp.float32) * 1.1
    beta = jnp.ones((hidden_dim,), jnp.float32) * 0.05
    run_mean = jnp.ones((hidden_dim,), jnp.float32) * 0.02
    run_var = jnp.ones((hidden_dim,), jnp.float32) * 0.9
    return (w1, b1, gamma, beta, run_mean, run_var, w2, b2, w3, b3)


def reference_forward(y, params, window_size):
    if y.ndim == 3:
        y = y.reshape(y.shape[0], -1)
    elif y.ndim == 2 and y.shape[1] == 1 and window_size > 1:
        y = jnp.tile(y, (1, window_size))
    w1, b1, gamma, beta, rm, rv, w2, b2, w3, b3 = params
    eps = 1e-5
    x = y @ w1 + b1
    x = (x - rm) / jnp.sqrt(rv + eps) * gamma + beta
    x = jnp.maximum(x, 0.0)
    x = jnp.maximum(x @ w2 + b2, 0.0)
    x = x @ w3 + b3
    return jax.nn.log_softmax(x, axis=1)


if __name__ == "__main__":
    batch = 8
    window_size = 4
    hidden_dim = 32
    num_states = 16

    key = jax.random.PRNGKey(0)
    k_in, k_par, k_big, k_seq = jax.random.split(key, 4)
    params = init_params(k_par, window_size, hidden_dim, num_states)

    # One-time parameter preparation (hoisted out of the per-call path).
    prep_f32 = prepare_params(params, compute_dtype=jnp.float32)
    prep_bf16 = prepare_params(params)                 # default: bf16 matmuls

    # --- small batch, f32 compute path: tight correctness check -------------
    y = jax.random.normal(k_in, (batch, window_size), jnp.float32)
    out = jax.block_until_ready(viterbinet_forward(y, prep_f32, window_size))
    ref = reference_forward(y, params, window_size)
    assert out.shape == (batch, num_states)
    assert jnp.allclose(out, ref, atol=2e-3, rtol=2e-3), "f32 mismatch vs reference"
    assert jnp.allclose(jnp.sum(jnp.exp(out), axis=1), 1.0, atol=1e-4)

    # --- 3-D input branch (reshape) and (B,1) repeat branch -----------------
    y_seq = jax.random.normal(k_seq, (batch, 2, 2), jnp.float32)
    out_seq = jax.block_until_ready(viterbinet_forward(y_seq, prep_f32, window_size))
    ref_seq = reference_forward(y_seq, params, window_size)
    assert out_seq.shape == (batch, num_states)
    assert jnp.allclose(out_seq, ref_seq, atol=2e-3, rtol=2e-3)

    y_rep = y[:, :1]
    out_rep = jax.block_until_ready(viterbinet_forward(y_rep, prep_f32, window_size))
    ref_rep = reference_forward(y_rep, params, window_size)
    assert jnp.allclose(out_rep, ref_rep, atol=2e-3, rtol=2e-3)

    # --- larger batch: even batch split (grid=(2,), minimal row padding),
    #     default bf16 matmul path with f32 accumulation ----------------------
    y_big = jax.random.normal(k_big, (600, window_size), jnp.float32)
    out_big = jax.block_until_ready(
        viterbinet_forward(y_big, prep_bf16, window_size))
    ref_big = reference_forward(y_big, params, window_size)
    assert out_big.shape == (600, num_states)
    assert jnp.allclose(out_big, ref_big, atol=5e-2, rtol=5e-2), \
        "bf16 grid-path mismatch vs reference"
    assert jnp.allclose(jnp.sum(jnp.exp(out_big), axis=1), 1.0, atol=5e-3)

    # --- bf16 output store (halves HBM writeback; f32 log_softmax math) -----
    out_b16 = jax.block_until_ready(
        viterbinet_forward(y_big, prep_bf16, window_size, out_dtype=jnp.bfloat16))
    assert out_b16.dtype == jnp.bfloat16 and out_b16.shape == (600, num_states)
    assert bool(jnp.all(jnp.isfinite(out_b16)))
    out_b16_f = out_b16.astype(jnp.float32)
    assert jnp.allclose(out_b16_f, ref_big, atol=1e-1, rtol=1e-1)
    assert jnp.allclose(jnp.sum(jnp.exp(out_b16_f), axis=1), 1.0, atol=3e-2)

    # --- padded output path (no post-kernel slice; consumer indexes it) -----
    out_pad = jax.block_until_ready(
        viterbinet_forward(y_big, prep_bf16, window_size, padded_output=True))
    assert out_pad.shape[0] >= 600 and out_pad.shape[1] % 128 == 0
    assert jnp.allclose(out_pad[:600, :num_states], out_big, atol=0, rtol=0)

    print("KERNEL_OK")
</pallas_src>

<mosaic_0001>
module attributes {stable_mosaic.version = 11 : i64} {
  func.func @viterbinet_kernel(%arg0: i32, %arg1: memref<8x4xf32, #tpu.memory_space<vmem>>, %arg2: memref<4x128xf32, #tpu.memory_space<vmem>>, %arg3: memref<128x128xf32, #tpu.memory_space<vmem>>, %arg4: memref<128x128xf32, #tpu.memory_space<vmem>>, %arg5: memref<3x128xf32, #tpu.memory_space<vmem>>, %arg6: memref<8x128xf32, #tpu.memory_space<vmem>>) attributes {dimension_semantics = [#tpu.dimension_semantics<parallel>], iteration_bounds = array<i64: 1>, scalar_prefetch = 0 : i64, scratch_operands = 0 : i64, tpu.core_type = #tpu.core_type<tc>, window_params = [{transform_indices = @transform_0, window_bounds = array<i64: 8, 4>}, {pipeline_mode = #tpu.pipeline_mode<synchronous>, transform_indices = @transform_1, window_bounds = array<i64: 4, 128>}, {pipeline_mode = #tpu.pipeline_mode<synchronous>, transform_indices = @transform_2, window_bounds = array<i64: 128, 128>}, {pipeline_mode = #tpu.pipeline_mode<synchronous>, transform_indices = @transform_3, window_bounds = array<i64: 128, 128>}, {pipeline_mode = #tpu.pipeline_mode<synchronous>, transform_indices = @transform_4, window_bounds = array<i64: 3, 128>}, {transform_indices = @transform_5, window_bounds = array<i64: 8, 128>}]} {
    %c0 = arith.constant 0 : index
    %c0_0 = arith.constant 0 : index
    %0 = vector.load %arg5[%c0, %c0_0] : memref<3x128xf32, #tpu.memory_space<vmem>>, vector<3x128xf32>
    %c0_1 = arith.constant 0 : index
    %c0_2 = arith.constant 0 : index
    %1 = vector.load %arg1[%c0_1, %c0_2] : memref<8x4xf32, #tpu.memory_space<vmem>>, vector<8x4xf32>
    %c0_3 = arith.constant 0 : index
    %c0_4 = arith.constant 0 : index
    %2 = vector.load %arg2[%c0_3, %c0_4] : memref<4x128xf32, #tpu.memory_space<vmem>>, vector<4x128xf32>
    %cst = arith.constant dense<0.000000e+00> : vector<8x128xf32>
    %3 = tpu.matmul %1, %2, %cst {dimension_numbers = #tpu.dot_dimension_numbers<[1], [0], [0], [1], [0, 0, 1, 1], [], []>} : vector<8x4xf32>, vector<4x128xf32>, vector<8x128xf32> -> vector<8x128xf32>
    %4 = vector.extract_strided_slice %0 {offsets = [0, 0], sizes = [1, 128], strides = [1, 1]} : vector<3x128xf32> to vector<1x128xf32>
    %5 = vector.broadcast %4 : vector<1x128xf32> to vector<8x128xf32>
    %6 = arith.addf %3, %5 : vector<8x128xf32>
    %cst_5 = arith.constant 0.000000e+00 : f32
    %7 = vector.broadcast %cst_5 : f32 to vector<8x128xf32>
    %8 = arith.maximumf %6, %7 : vector<8x128xf32>
    %c0_6 = arith.constant 0 : index
    %c0_7 = arith.constant 0 : index
    %9 = vector.load %arg3[%c0_6, %c0_7] : memref<128x128xf32, #tpu.memory_space<vmem>>, vector<128x128xf32>
    %cst_8 = arith.constant dense<0.000000e+00> : vector<8x128xf32>
    %10 = tpu.matmul %8, %9, %cst_8 {dimension_numbers = #tpu.dot_dimension_numbers<[1], [0], [0], [1], [0, 0, 1, 1], [], []>} : vector<8x128xf32>, vector<128x128xf32>, vector<8x128xf32> -> vector<8x128xf32>
    %11 = vector.extract_strided_slice %0 {offsets = [1, 0], sizes = [1, 128], strides = [1, 1]} : vector<3x128xf32> to vector<1x128xf32>
    %12 = vector.broadcast %11 : vector<1x128xf32> to vector<8x128xf32>
    %13 = arith.addf %10, %12 : vector<8x128xf32>
    %cst_9 = arith.constant 0.000000e+00 : f32
    %14 = vector.broadcast %cst_9 : f32 to vector<8x128xf32>
    %15 = arith.maximumf %13, %14 : vector<8x128xf32>
    %c0_10 = arith.constant 0 : index
    %c0_11 = arith.constant 0 : index
    %16 = vector.load %arg4[%c0_10, %c0_11] : memref<128x128xf32, #tpu.memory_space<vmem>>, vector<128x128xf32>
    %cst_12 = arith.constant dense<0.000000e+00> : vector<8x128xf32>
    %17 = tpu.matmul %15, %16, %cst_12 {dimension_numbers = #tpu.dot_dimension_numbers<[1], [0], [0], [1], [0, 0, 1, 1], [], []>} : vector<8x128xf32>, vector<128x128xf32>, vector<8x128xf32> -> vector<8x128xf32>
    %18 = vector.extract_strided_slice %0 {offsets = [2, 0], sizes = [1, 128], strides = [1, 1]} : vector<3x128xf32> to vector<1x128xf32>
    %19 = vector.broadcast %18 : vector<1x128xf32> to vector<8x128xf32>
    %20 = arith.addf %17, %19 : vector<8x128xf32>
    %cst_13 = arith.constant dense<0xFF800000> : vector<8xf32>
    %21 = vector.multi_reduction <maximumf>, %20, %cst_13 [1] : vector<8x128xf32> to vector<8xf32>
    %22 = vector.shape_cast %21 : vector<8xf32> to vector<8x1xf32>
    %23 = vector.broadcast %22 : vector<8x1xf32> to vector<8x128xf32>
    %24 = arith.subf %20, %23 : vector<8x128xf32>
    %25 = math.exp %24 : vector<8x128xf32>
    %cst_14 = arith.constant dense<0.000000e+00> : vector<8xf32>
    %26 = vector.multi_reduction <add>, %25, %cst_14 [1] : vector<8x128xf32> to vector<8xf32>
    %27 = vector.shape_cast %26 : vector<8xf32> to vector<8x1xf32>
    %28 = math.log %27 : vector<8x1xf32>
    %29 = vector.broadcast %28 : vector<8x1xf32> to vector<8x128xf32>
    %30 = arith.subf %24, %29 : vector<8x128xf32>
    %c0_15 = arith.constant 0 : index
    %c0_16 = arith.constant 0 : index
    %31 = vector.load %arg6[%c0_15, %c0_16] : memref<8x128xf32, #tpu.memory_space<vmem>>, vector<8x128xf32>
    tpu.vector_store %arg6[%c0_15, %c0_16], %30 {strides = array<i32>} : memref<8x128xf32, #tpu.memory_space<vmem>>, vector<8x128xf32>,
    return
  }
  func.func @transform_0(%arg0: i32) -> (i32, i32) {
    %c0_i32 = arith.constant 0 : i32
    %c0_i32_0 = arith.constant 0 : i32
    return %arg0, %c0_i32 : i32, i32
  }
  func.func @transform_1(%arg0: i32) -> (i32, i32) {
    %c0_i32 = arith.constant 0 : i32
    %c0_i32_0 = arith.constant 0 : i32
    %c0_i32_1 = arith.constant 0 : i32
    return %c0_i32, %c0_i32_0 : i32, i32
  }
  func.func @transform_2(%arg0: i32) -> (i32, i32) {
    %c0_i32 = arith.constant 0 : i32
    %c0_i32_0 = arith.constant 0 : i32
    %c0_i32_1 = arith.constant 0 : i32
    return %c0_i32, %c0_i32_0 : i32, i32
  }
  func.func @transform_3(%arg0: i32) -> (i32, i32) {
    %c0_i32 = arith.constant 0 : i32
    %c0_i32_0 = arith.constant 0 : i32
    %c0_i32_1 = arith.constant 0 : i32
    return %c0_i32, %c0_i32_0 : i32, i32
  }
  func.func @transform_4(%arg0: i32) -> (i32, i32) {
    %c0_i32 = arith.constant 0 : i32
    %c0_i32_0 = arith.constant 0 : i32
    %c0_i32_1 = arith.constant 0 : i32
    return %c0_i32, %c0_i32_0 : i32, i32
  }
  func.func @transform_5(%arg0: i32) -> (i32, i32) {
    %c0_i32 = arith.constant 0 : i32
    %c0_i32_0 = arith.constant 0 : i32
    return %arg0, %c0_i32 : i32, i32
  }
}

</mosaic_0001>

<llo_original>
// kernel: tpu_custom_call.1
$region0: #{tpu_custom_call.1}
  #allocation0 [shape = 'u32[]', space=smem, size = 0x4, offset = 0x4, fixed_abs, tag = 'smem constant byte address 0x4 - core index']
  #allocation1 [shape = 'u32[72,128]{1,0:T(1,128)}', space=vmem, size = 0x9000, scoped, tag = 'internal scratch']
  %s0 = inlined_call_operand.vmem [shape: f32[8,4], index: 0, kind: input, shape index: {}]
  %s1 = inlined_call_operand.vmem [shape: f32[4,128], index: 1, kind: input, shape index: {}]
  %s2 = inlined_call_operand.hbm [shape: f32[128,128], index: 2, kind: input, shape index: {}]
  %s3 = inlined_call_operand.hbm [shape: f32[128,128], index: 3, kind: input, shape index: {}]
  %s4 = inlined_call_operand.vmem [shape: f32[3,128], index: 4, kind: input, shape index: {}]
  %s5 = inlined_call_operand.hbm [shape: f32[8,128], index: 5, kind: output, shape index: {}]
  %s6 = sld [smem:[#allocation0]]
  $region38: #{tpu_custom_call.1} parent=0
    _
  %s8 = ssub.s32 1, %s6
  %s9 = scalar_select 0, %s8, %s6
  $region1: #{tpu_custom_call.1} parent=0
    #allocation2 [shape = 'u8[65536]{0}', space=vmem, size = 0x10000, scoped, tag = 'input window, operand 2, single buffered']
    #allocation3 [shape = 's32[1]{0}', space=sflag, size = 0x4, scoped, tag = 'scoped memory for tpu_custom_call.1']
    #allocation4 [shape = 's32[1]{0}', space=sflag, size = 0x4, scoped, tag = 'scoped memory for tpu_custom_call.1']
    #allocation5 [shape = 'u8[65536]{0}', space=vmem, size = 0x10000, scoped, tag = 'input window, operand 3, single buffered']
    #allocation6 [shape = 's32[1]{0}', space=sflag, size = 0x4, scoped, tag = 'scoped memory for tpu_custom_call.1']
    #allocation7 [shape = 'u8[4096]{0}', space=vmem, size = 0x1000, scoped, tag = 'output window, operand 0, single buffered']
    %10 = vsyncpa [#allocation3], 0
    %11 = vsyncpa [#allocation6], 0
    %12 = vsyncpa [#allocation4], 0
    // Predicated region
    $region2: #{tpu_custom_call.1} parent=1 // pred_check
      _
    $region3: #{tpu_custom_call.1} parent=1 // pred_check_branch
      %14 = sbr.rel (0) target = $region5
    $region4: #{tpu_custom_call.1} parent=1 // pred_region
      _
    $region5: #{tpu_custom_call.1} parent=1 // pred_fallthru
      _
    // Predicated region
    $region6: #{tpu_custom_call.1} parent=1 // pred_check
      _
    $region7: #{tpu_custom_call.1} parent=1 // pred_check_branch
      %16 = sbr.rel (0) target = $region9
    $region8: #{tpu_custom_call.1} parent=1 // pred_region
      _
    $region9: #{tpu_custom_call.1} parent=1 // pred_fallthru
      _
    // Predicated region
    $region10: #{tpu_custom_call.1} parent=1 // pred_check
      _
    $region11: #{tpu_custom_call.1} parent=1 // pred_check_branch
      %18 = sbr.rel (0) target = $region13
    $region12: #{tpu_custom_call.1} parent=1 // pred_region
      %20 = vsyncadd [#allocation3], 0
      %s21 = sshll.u32 %s2, 4
      %s22 = int_to_ptr.hbm [resolvable:$true] %s21
      %s23 = sshll.u32 [#allocation2], 4
      %s24 = int_to_ptr.vmem [resolvable:$true] %s23
      %29 = dma.hbm_to_vmem [thread:$0]  %s22, 2048, %s24, [#allocation3], 128, 128, 8
    $region13: #{tpu_custom_call.1} parent=1 // pred_fallthru
      _
    // Predicated region
    $region14: #{tpu_custom_call.1} parent=1 // pred_check
      _
    $region15: #{tpu_custom_call.1} parent=1 // pred_check_branch
      %31 = sbr.rel (0) target = $region17
    $region16: #{tpu_custom_call.1} parent=1 // pred_region
      %33 = vsyncadd [#allocation6], 0
      %s34 = sshll.u32 %s3, 4
      %s35 = int_to_ptr.hbm [resolvable:$true] %s34
      %s36 = sshll.u32 [#allocation5], 4
      %s37 = int_to_ptr.vmem [resolvable:$true] %s36
      %42 = dma.hbm_to_vmem [thread:$0]  %s35, 2048, %s37, [#allocation6], 128, 128, 8
    $region17: #{tpu_custom_call.1} parent=1 // pred_fallthru
      _
    // Predicated region
    $region18: #{tpu_custom_call.1} parent=1 // pred_check
      _
    $region19: #{tpu_custom_call.1} parent=1 // pred_check_branch
      %44 = sbr.rel (0) target = $region21
    $region20: #{tpu_custom_call.1} parent=1 // pred_region
      _
    $region21: #{tpu_custom_call.1} parent=1 // pred_fallthru
      _
    // Predicated region
    $region22: #{tpu_custom_call.1} parent=1 // pred_check
      _
    $region23: #{tpu_custom_call.1} parent=1 // pred_check_branch
      %46 = sbr.rel (0) target = $region25
    $region24: #{tpu_custom_call.1} parent=1 // pred_region
      %48 = dma.done [#allocation3], 2048
    $region25: #{tpu_custom_call.1} parent=1 // pred_fallthru
      _
    // Predicated region
    $region26: #{tpu_custom_call.1} parent=1 // pred_check
      _
    $region27: #{tpu_custom_call.1} parent=1 // pred_check_branch
      %50 = sbr.rel (0) target = $region29
    $region28: #{tpu_custom_call.1} parent=1 // pred_region
      %52 = dma.done [#allocation6], 2048
    $region29: #{tpu_custom_call.1} parent=1 // pred_fallthru
      _
    %v53 = vld [vmem:[%s4] sm:$0x7]
    %v54 = vld [vmem:[%s0] sm:$0xff]
    %v55 = vld [vmem:[%s1] sm:$0xf]
    %v56 = vperm.slane %v53, 0
    %vm57 = vcmask 31744
    %v59 = vsel %vm57, %v54, 0
    %vm61 = vcmask 1043456
    %v63 = vsel %vm61, %v55, 0
    %65 = vmatpush.msra.mxu0 0.0
    %66 = vmatpush.msra.mxu0 0.0
    %67 = vmatpush.msra.mxu0 0.0
    %68 = vmatpush.msra.mxu0 0.0
    %69 = vmatpush.msra.mxu0 0.0
    %70 = vmatpush.msra.mxu0 0.0
    %71 = vmatpush.msra.mxu0 0.0
    %72 = vmatpush.msra.mxu0 0.0
    %73 = vmatpush.msra.mxu0 0.0
    %74 = vmatpush.msra.mxu0 0.0
    %75 = vmatpush.msra.mxu0 0.0
    %76 = vmatpush.msra.mxu0 0.0
    %77 = vmatpush.msra.mxu0 0.0
    %78 = vmatpush.msra.mxu0 0.0
    %79 = vmatpush.msra.mxu0 0.0
    %80 = vmatpush.msra.mxu0 %v63
    %81 = vmatmul.f32.gmra.mxu0 %v59
    %v82 = vpop.f32.mrf.mxu0
    %v83 = vadd.f32 %v56, %v82
    %84 = vdwg.mxu0
    %v85 = vmax.f32 %v83, 0.0
    %v86 = vld [vmem:[#allocation2] sm:$0xff]
    %v87 = vld [vmem:[#allocation2 + $0x8] sm:$0xff]
    %v88 = vld [vmem:[#allocation2 + $0x10] sm:$0xff]
    %v89 = vld [vmem:[#allocation2 + $0x18] sm:$0xff]
    %v90 = vld [vmem:[#allocation2 + $0x20] sm:$0xff]
    %v91 = vld [vmem:[#allocation2 + $0x28] sm:$0xff]
    %v92 = vld [vmem:[#allocation2 + $0x30] sm:$0xff]
    %v93 = vld [vmem:[#allocation2 + $0x38] sm:$0xff]
    %v94 = vld [vmem:[#allocation2 + $0x40] sm:$0xff]
    %v95 = vld [vmem:[#allocation2 + $0x48] sm:$0xff]
    %v96 = vld [vmem:[#allocation2 + $0x50] sm:$0xff]
    %v97 = vld [vmem:[#allocation2 + $0x58] sm:$0xff]
    %v98 = vld [vmem:[#allocation2 + $0x60] sm:$0xff]
    %v99 = vld [vmem:[#allocation2 + $0x68] sm:$0xff]
    %v100 = vld [vmem:[#allocation2 + $0x70] sm:$0xff]
    %v101 = vld [vmem:[#allocation2 + $0x78] sm:$0xff]
    %v102 = vperm.slane %v53, 1
    %103 = vmatpush.msra.mxu0 %v101
    %104 = vmatpush.msra.mxu0 %v100
    %105 = vmatpush.msra.mxu0 %v99
    %106 = vmatpush.msra.mxu0 %v98
    %107 = vmatpush.msra.mxu0 %v97
    %108 = vmatpush.msra.mxu0 %v96
    %109 = vmatpush.msra.mxu0 %v95
    %110 = vmatpush.msra.mxu0 %v94
    %111 = vmatpush.msra.mxu0 %v93
    %112 = vmatpush.msra.mxu0 %v92
    %113 = vmatpush.msra.mxu0 %v91
    %114 = vmatpush.msra.mxu0 %v90
    %115 = vmatpush.msra.mxu0 %v89
    %116 = vmatpush.msra.mxu0 %v88
    %117 = vmatpush.msra.mxu0 %v87
    %118 = vmatpush.msra.mxu0 %v86
    %119 = vmatmul.f32.gmra.mxu0 %v85
    %v120 = vpop.f32.mrf.mxu0
    %v121 = vadd.f32 %v102, %v120
    %122 = vdwg.mxu0
    %v123 = vmax.f32 %v121, 0.0
    %v124 = vld [vmem:[#allocation5] sm:$0xff]
    %v125 = vld [vmem:[#allocation5 + $0x8] sm:$0xff]
    %v126 = vld [vmem:[#allocation5 + $0x10] sm:$0xff]
    %v127 = vld [vmem:[#allocation5 + $0x18] sm:$0xff]
    %v128 = vld [vmem:[#allocation5 + $0x20] sm:$0xff]
    %v129 = vld [vmem:[#allocation5 + $0x28] sm:$0xff]
    %v130 = vld [vmem:[#allocation5 + $0x30] sm:$0xff]
    %v131 = vld [vmem:[#allocation5 + $0x38] sm:$0xff]
    %v132 = vld [vmem:[#allocation5 + $0x40] sm:$0xff]
    %v133 = vld [vmem:[#allocation5 + $0x48] sm:$0xff]
    %v134 = vld [vmem:[#allocation5 + $0x50] sm:$0xff]
    %v135 = vld [vmem:[#allocation5 + $0x58] sm:$0xff]
    %v136 = vld [vmem:[#allocation5 + $0x60] sm:$0xff]
    %v137 = vld [vmem:[#allocation5 + $0x68] sm:$0xff]
    %v138 = vld [vmem:[#allocation5 + $0x70] sm:$0xff]
    %v139 = vld [vmem:[#allocation5 + $0x78] sm:$0xff]
    %v140 = vperm.slane %v53, 2
    %141 = vmatpush.msra.mxu0 %v139
    %142 = vmatpush.msra.mxu0 %v138
    %143 = vmatpush.msra.mxu0 %v137
    %144 = vmatpush.msra.mxu0 %v136
    %145 = vmatpush.msra.mxu0 %v135
    %146 = vmatpush.msra.mxu0 %v134
    %147 = vmatpush.msra.mxu0 %v133
    %148 = vmatpush.msra.mxu0 %v132
    %149 = vmatpush.msra.mxu0 %v131
    %150 = vmatpush.msra.mxu0 %v130
    %151 = vmatpush.msra.mxu0 %v129
    %152 = vmatpush.msra.mxu0 %v128
    %153 = vmatpush.msra.mxu0 %v127
    %154 = vmatpush.msra.mxu0 %v126
    %155 = vmatpush.msra.mxu0 %v125
    %156 = vmatpush.msra.mxu0 %v124
    %157 = vmatmul.f32.gmra.mxu0 %v123
    %v158 = vpop.f32.mrf.mxu0
    %v159 = vadd.f32 %v140, %v158
    %160 = vdwg.mxu0
    %161 = vmax.xlane.f32.xlu0 %v159
    %v162 = vpop.xlane.xlu0 %161
    %v163 = vsub.f32 %v159, %v162
    %v164 = vmul.f32 %v163, 1.442695
    %v165 = vpow.pop %v164
    %166 = vadd.xlane.f32.xlu0 %v165
    %v167 = vpop.xlane.xlu0 %166
    %v168 = vlog2.pop %v167
    %v169 = vmul.f32 %v168, 0.6931472
    %v170 = vsub.f32 %v163, %v169
    %171 = vst [vmem:[#allocation7] sm:$0xff] %v170
    // Predicated region
    $region30: #{tpu_custom_call.1} parent=1 // pred_check
      _
    $region31: #{tpu_custom_call.1} parent=1 // pred_check_branch
      %173 = sbr.rel (0) target = $region33
    $region32: #{tpu_custom_call.1} parent=1 // pred_region
      %175 = vsyncadd [#allocation4], 0
      %s177 = sshll.u32 [#allocation7], 4
      %s178 = int_to_ptr.vmem [resolvable:$true] %s177
      %s179 = sshll.u32 %s5, 4
      %s180 = int_to_ptr.hbm [resolvable:$true] %s179
      %182 = dma.vmem_to_hbm [thread:$0]  %s178, 128, %s180, [#allocation4]
    $region33: #{tpu_custom_call.1} parent=1 // pred_fallthru
      _
    // Predicated region
    $region34: #{tpu_custom_call.1} parent=1 // pred_check
      _
    $region35: #{tpu_custom_call.1} parent=1 // pred_check_branch
      %184 = sbr.rel (0) target = $region37
    $region36: #{tpu_custom_call.1} parent=1 // pred_region
      %186 = dma.done [#allocation4], 128
    $region37: #{tpu_custom_call.1} parent=1 // pred_fallthru
      _
    %187 = vsyncpa [#allocation3], 1
    %188 = vsyncpa [#allocation6], 1
    %189 = vsyncpa [#allocation4], 1

</llo_original>
